<compile_context>
chip_gen: v7x
topology: tpu7x:2x2x1
jax: 0.10.0
libtpu: 0.0.40
codegen_flags: <defaults>
</compile_context>

<pallas_src>
import math

import jax
import jax.numpy as jnp
from jax.experimental import pallas as pl
from jax.experimental.pallas import tpu as pltpu


def groupnet_kernel(x_ref, w1_ref, s_ref, o_ref):
    """One batch tile of fc1 -> relu -> fc2, all in native (batch, feature) layout.

    x_ref : (TB, D) f32 VMEM  -- batch on sublanes, features on lanes (native x layout)
    w1_ref: (1, D)  f32 VMEM  -- fc1 weight row (hidden1_size == 1)
    s_ref : (3,)    f32 SMEM  -- [b1, w2, b2]
    o_ref : (TB, 1) f32 VMEM  -- per-row scalar output
    """
    # fc1 on VPU + XLU: elementwise multiply (sublane-broadcast of the (1, D)
    # weight row) then reduce the feature axis along lanes.  Kernel is HBM
    # bandwidth bound; VPU/XLU work here is filler under the DMA.
    prod = x_ref[...] * w1_ref[...]                  # (TB, D)  VPU
    h = jnp.sum(prod, axis=-1, keepdims=True)        # (TB, 1)  XLU lane reduce
    h = h + s_ref[0]                                 # + b1
    h = jnp.maximum(h, 0.0)                          # relu1
    o_ref[...] = h * s_ref[1] + s_ref[2]             # fc2 = Linear(1, 1): scalar affine


def _pick_batch_tile(B, D, target_bytes=2 << 20):
    """Bytes-based tile sizing.

    Each input block is TB * D * 4 bytes; aim for ~2 MiB so the per-grid-step
    overhead is amortized (near HBM roofline) while double-buffered blocks stay
    far below the scoped-VMEM defaults (16 MiB v5e, 32 MiB v6e/v7x) for any D.
    """
    tb = max(8, (target_bytes // (4 * D)) // 8 * 8)   # multiple of 8 sublanes
    b_up = ((B + 7) // 8) * 8                         # don't exceed (rounded) batch
    return min(tb, b_up)


def groupnet_forward(x, params):
    """x: (B, D) f32.  params: dict of fc1/fc2 weights.  Returns (B, 1) f32."""
    w1, b1, w2, b2 = params["w1"], params["b1"], params["w2"], params["b2"]
    x = x.astype(jnp.float32)
    B, D = x.shape
    H = w1.shape[0]
    if H != 1:
        # fc2 = nn.Linear(1, 1) in the reference module only type-checks at H == 1.
        raise ValueError("GroupNet requires hidden1_size == 1 (fc2 = nn.Linear(1, 1)).")

    w1_row = w1.reshape(1, D).astype(jnp.float32)     # (1, D) weight row, no transpose copy
    scalars = jnp.concatenate(                        # (3,) = [b1, w2, b2] -> one SMEM ref
        [b1.reshape(-1), w2.reshape(-1), b2.reshape(-1)]
    ).astype(jnp.float32)

    TB = _pick_batch_tile(B, D)
    B_pad = ((B + TB - 1) // TB) * TB                 # cdiv-style tail padding
    x_in = jnp.pad(x, ((0, B_pad - B), (0, 0))) if B_pad != B else x
    grid = (B_pad // TB,)

    out = pl.pallas_call(
        groupnet_kernel,
        out_shape=jax.ShapeDtypeStruct((B_pad, 1), jnp.float32),
        grid=grid,
        in_specs=[
            pl.BlockSpec((TB, D), lambda i: (i, 0)),             # x batch tile (contiguous rows)
            pl.BlockSpec((1, D), lambda i: (0, 0)),              # weight row (resident)
            pl.BlockSpec(memory_space=pltpu.MemorySpace.SMEM),   # [b1, w2, b2] scalars
        ],
        out_specs=pl.BlockSpec((TB, 1), lambda i: (i, 0)),       # per-row scalar output
        compiler_params=pltpu.CompilerParams(
            dimension_semantics=("parallel",)),
        cost_estimate=pl.CostEstimate(
            flops=2 * B * D + 3 * B,
            transcendentals=0,
            bytes_accessed=B * D * 4 + B * 4 + D * 4 + 3 * 4),
    )(x_in, w1_row, scalars)

    return out[:B]


def init_params(key, input_size, hidden1_size):
    """Deterministic PyTorch-style uniform(-1/sqrt(fan_in), 1/sqrt(fan_in)) init."""
    k1, k2, k3, k4 = jax.random.split(key, 4)
    bound1 = 1.0 / math.sqrt(input_size)
    bound2 = 1.0 / math.sqrt(1.0)
    w1 = jax.random.uniform(k1, (hidden1_size, input_size), jnp.float32,
                            minval=-bound1, maxval=bound1)
    b1 = jax.random.uniform(k2, (hidden1_size,), jnp.float32,
                            minval=-bound1, maxval=bound1)
    w2 = jax.random.uniform(k3, (1, 1), jnp.float32,
                            minval=-bound2, maxval=bound2)
    b2 = jax.random.uniform(k4, (1,), jnp.float32,
                            minval=-bound2, maxval=bound2)
    return {"w1": w1, "b1": b1, "w2": w2, "b2": b2}


if __name__ == "__main__":
    key = jax.random.PRNGKey(0)
    kx, kp = jax.random.split(key)

    B = 8              # batch
    input_size = 32    # features
    hidden1_size = 1   # must be 1 for fc2 = nn.Linear(1, 1) to be shape-valid
    num_classes = 10   # unused by the module's forward

    x = jax.random.normal(kx, (B, input_size), dtype=jnp.float32)
    params = init_params(kp, input_size, hidden1_size)

    out = groupnet_forward(x, params)
    out = jax.block_until_ready(out)

    # Pure-JAX reference check of the same math.
    ref = jnp.maximum(x @ params["w1"].T + params["b1"], 0.0)
    ref = ref * params["w2"][0, 0] + params["b2"][0]
    assert out.shape == (B, hidden1_size)
    assert jnp.allclose(out, ref, atol=1e-5, rtol=1e-5)

    print("KERNEL_OK")
</pallas_src>

<mosaic_0001>
module attributes {stable_mosaic.version = 11 : i64} {
  func.func @groupnet_kernel(%arg0: i32, %arg1: memref<8x32xf32, #tpu.memory_space<vmem>>, %arg2: memref<1x32xf32, #tpu.memory_space<vmem>>, %arg3: memref<3xf32, #tpu.memory_space<smem>>, %arg4: memref<8x1xf32, #tpu.memory_space<vmem>>) attributes {dimension_semantics = [#tpu.dimension_semantics<parallel>], iteration_bounds = array<i64: 1>, scalar_prefetch = 0 : i64, scratch_operands = 0 : i64, tpu.core_type = #tpu.core_type<tc>, window_params = [{transform_indices = @transform_0, window_bounds = array<i64: 8, 32>}, {pipeline_mode = #tpu.pipeline_mode<synchronous>, transform_indices = @transform_1, window_bounds = array<i64: 1, 32>}, {transform_indices = @transform_2, window_bounds = array<i64: 3>}, {transform_indices = @transform_3, window_bounds = array<i64: 8, 1>}]} {
    %c0 = arith.constant 0 : index
    %c0_0 = arith.constant 0 : index
    %0 = vector.load %arg1[%c0, %c0_0] : memref<8x32xf32, #tpu.memory_space<vmem>>, vector<8x32xf32>
    %c0_1 = arith.constant 0 : index
    %c0_2 = arith.constant 0 : index
    %1 = vector.load %arg2[%c0_1, %c0_2] : memref<1x32xf32, #tpu.memory_space<vmem>>, vector<1x32xf32>
    %2 = vector.broadcast %1 : vector<1x32xf32> to vector<8x32xf32>
    %3 = arith.mulf %0, %2 : vector<8x32xf32>
    %cst = arith.constant dense<0.000000e+00> : vector<8xf32>
    %4 = vector.multi_reduction <add>, %3, %cst [1] : vector<8x32xf32> to vector<8xf32>
    %5 = vector.shape_cast %4 : vector<8xf32> to vector<8x1xf32>
    %c0_3 = arith.constant 0 : index
    %6 = memref.load %arg3[%c0_3] : memref<3xf32, #tpu.memory_space<smem>>
    %7 = vector.broadcast %6 : f32 to vector<8x1xf32>
    %8 = arith.addf %5, %7 : vector<8x1xf32>
    %cst_4 = arith.constant 0.000000e+00 : f32
    %9 = vector.broadcast %cst_4 : f32 to vector<8x1xf32>
    %10 = arith.maximumf %8, %9 : vector<8x1xf32>
    %c1 = arith.constant 1 : index
    %11 = memref.load %arg3[%c1] : memref<3xf32, #tpu.memory_space<smem>>
    %12 = vector.broadcast %11 : f32 to vector<8x1xf32>
    %13 = arith.mulf %10, %12 : vector<8x1xf32>
    %c2 = arith.constant 2 : index
    %14 = memref.load %arg3[%c2] : memref<3xf32, #tpu.memory_space<smem>>
    %15 = vector.broadcast %14 : f32 to vector<8x1xf32>
    %16 = arith.addf %13, %15 : vector<8x1xf32>
    %c0_5 = arith.constant 0 : index
    %c0_6 = arith.constant 0 : index
    %17 = vector.load %arg4[%c0_5, %c0_6] : memref<8x1xf32, #tpu.memory_space<vmem>>, vector<8x1xf32>
    tpu.vector_store %arg4[%c0_5, %c0_6], %16 {strides = array<i32>} : memref<8x1xf32, #tpu.memory_space<vmem>>, vector<8x1xf32>,
    return
  }
  func.func @transform_0(%arg0: i32) -> (i32, i32) {
    %c0_i32 = arith.constant 0 : i32
    %c0_i32_0 = arith.constant 0 : i32
    return %arg0, %c0_i32 : i32, i32
  }
  func.func @transform_1(%arg0: i32) -> (i32, i32) {
    %c0_i32 = arith.constant 0 : i32
    %c0_i32_0 = arith.constant 0 : i32
    %c0_i32_1 = arith.constant 0 : i32
    return %c0_i32, %c0_i32_0 : i32, i32
  }
  func.func @transform_2(%arg0: i32) -> i32 {
    %c0_i32 = arith.constant 0 : i32
    %c0_i32_0 = arith.constant 0 : i32
    return %c0_i32 : i32
  }
  func.func @transform_3(%arg0: i32) -> (i32, i32) {
    %c0_i32 = arith.constant 0 : i32
    %c0_i32_0 = arith.constant 0 : i32
    return %arg0, %c0_i32 : i32, i32
  }
}

</mosaic_0001>

<llo_original>
// kernel: tpu_custom_call.1
$region0: #{tpu_custom_call.1}
  #allocation0 [shape = 'u32[]', space=smem, size = 0x4, offset = 0x4, fixed_abs, tag = 'smem constant byte address 0x4 - core index']
  #allocation1 [shape = 'u32[144,128]{1,0:T(1,128)}', space=vmem, size = 0x12000, scoped, tag = 'internal scratch']
  %s0 = inlined_call_operand.hbm [shape: f32[8,32], index: 0, kind: input, shape index: {}]
  %s1 = inlined_call_operand.vmem [shape: f32[1,32], index: 1, kind: input, shape index: {}]
  %s2 = inlined_call_operand.vmem [shape: f32[3], index: 2, kind: input, shape index: {}]
  %s3 = inlined_call_operand.vmem [shape: f32[8,1], index: 3, kind: output, shape index: {}]
  %s4 = sld [smem:[#allocation0]]
  $region30: #{tpu_custom_call.1} parent=0
    _
  %s6 = ssub.s32 1, %s4
  %s7 = scalar_select 0, %s6, %s4
  $region1: #{tpu_custom_call.1} parent=0
    #allocation2 [shape = 'u8[4096]{0}', space=vmem, size = 0x1000, scoped, tag = 'input window, operand 0, single buffered']
    #allocation3 [shape = 's32[1]{0}', space=sflag, size = 0x4, scoped, tag = 'scoped memory for tpu_custom_call.1']
    #allocation4 [shape = 's32[1]{0}', space=sflag, size = 0x4, scoped, tag = 'scoped memory for tpu_custom_call.1']
    #allocation5 [shape = 'u8[512]{0}', space=smem, size = 0x200, scoped, tag = 'input window, operand 2, single buffered']
    %8 = vsyncpa [#allocation3], 0
    %9 = vsyncpa [#allocation4], 0
    // Predicated region
    $region2: #{tpu_custom_call.1} parent=1 // pred_check
      _
    $region3: #{tpu_custom_call.1} parent=1 // pred_check_branch
      %11 = sbr.rel (0) target = $region5
    $region4: #{tpu_custom_call.1} parent=1 // pred_region
      %s13 = ssub.s32 128, 128
      %14 = vsyncadd [#allocation3], %s13
      %s16 = sshll.u32 [#allocation2], 4
      %s17 = int_to_ptr.vmem [resolvable:$true] %s16
      %19 = dma.hbm_to_vmem [thread:$0]  %s0, 128, %s17, [#allocation3]
    $region5: #{tpu_custom_call.1} parent=1 // pred_fallthru
      _
    // Predicated region
    $region6: #{tpu_custom_call.1} parent=1 // pred_check
      _
    $region7: #{tpu_custom_call.1} parent=1 // pred_check_branch
      %21 = sbr.rel (0) target = $region9
    $region8: #{tpu_custom_call.1} parent=1 // pred_region
      _
    $region9: #{tpu_custom_call.1} parent=1 // pred_fallthru
      _
    // Predicated region
    $region10: #{tpu_custom_call.1} parent=1 // pred_check
      _
    $region11: #{tpu_custom_call.1} parent=1 // pred_check_branch
      %23 = sbr.rel (0) target = $region13
    $region12: #{tpu_custom_call.1} parent=1 // pred_region
      %s25 = ssub.s32 16, 16
      %26 = vsyncadd [#allocation4], %s25
      %s28 = sshll.u32 %s2, 4
      %s29 = int_to_ptr.vmem [resolvable:$true] %s28
      %31 = dma.vmem_to_smem %s29, 16, [#allocation5], [#allocation4]
    $region13: #{tpu_custom_call.1} parent=1 // pred_fallthru
      _
    // Predicated region
    $region14: #{tpu_custom_call.1} parent=1 // pred_check
      _
    $region15: #{tpu_custom_call.1} parent=1 // pred_check_branch
      %33 = sbr.rel (0) target = $region17
    $region16: #{tpu_custom_call.1} parent=1 // pred_region
      %34 = dma.done [#allocation3], 128
    $region17: #{tpu_custom_call.1} parent=1 // pred_fallthru
      _
    // Predicated region
    $region18: #{tpu_custom_call.1} parent=1 // pred_check
      _
    $region19: #{tpu_custom_call.1} parent=1 // pred_check_branch
      %36 = sbr.rel (0) target = $region21
    $region20: #{tpu_custom_call.1} parent=1 // pred_region
      %37 = dma.done [#allocation4], 16
    $region21: #{tpu_custom_call.1} parent=1 // pred_fallthru
      _
    %38 = sfence
    %v39 = vld [vmem:[#allocation2] sm:$0xff]
    %v40 = vld [vmem:[%s1] sm:$0x1]
    %v42 = vlaneseq
    %v43 = vshrl.u32 %v42, 7
    %v44 = vsub.s32 0, %v43
    %v45 = vrot.slane %v40, %v44
    %v47 = vmul.f32 %v39, %v45
    %vm48 = vcmask 261120
    %v49 = vsel %vm48, %v47, 0.0
    %50 = vadd.xlane.f32.xlu0 %v49
    %v51 = vpop.xlane.xlu0 %50
    %s52 = sld [smem:[#allocation5]]
    %v53 = vstv %s52
    %v54 = vadd.f32 %v51, %v53
    %v55 = vmax.f32 %v54, 0.0
    %s56 = sld [smem:[#allocation5 + $0x1]]
    %v57 = vstv %s56
    %v58 = vmul.f32 %v55, %v57
    %s59 = sld [smem:[#allocation5 + $0x2]]
    %v60 = vstv %s59
    %v61 = vadd.f32 %v58, %v60
    %vm62 = vcmask 7168
    %63 = vst.msk [vmem:[%s3] sm:$0xff] %vm62, %v61
    // Predicated region
    $region22: #{tpu_custom_call.1} parent=1 // pred_check
      _
    $region23: #{tpu_custom_call.1} parent=1 // pred_check_branch
      %65 = sbr.rel (0) target = $region25
    $region24: #{tpu_custom_call.1} parent=1 // pred_region
      _
    $region25: #{tpu_custom_call.1} parent=1 // pred_fallthru
      _
    // Predicated region
    $region26: #{tpu_custom_call.1} parent=1 // pred_check
      _
    $region27: #{tpu_custom_call.1} parent=1 // pred_check_branch
      %67 = sbr.rel (0) target = $region29
    $region28: #{tpu_custom_call.1} parent=1 // pred_region
      _
    $region29: #{tpu_custom_call.1} parent=1 // pred_fallthru
      _
    %68 = vsyncpa [#allocation3], 1
    %69 = vsyncpa [#allocation4], 1

</llo_original>
